<compile_context>
chip_gen: v7x
topology: tpu7x:2x2x1
jax: 0.10.0
libtpu: 0.0.40
codegen_flags: <defaults>
</compile_context>

<pallas_src>
import jax
import jax.numpy as jnp
from jax.experimental import pallas as pl
from jax.experimental.pallas import tpu as pltpu


def pointnet_head_kernel(x_ref, w1_ref, b1_ref, w2_ref, b2_ref, wm_ref, bm_ref, o_ref):
    # x_ref: (Cin_pad, TN) channel-major block — channels on sublanes, points on lanes (bf16).
    x = x_ref[...]

    # net: Conv1d(Cin, H1, kernel_size=1) + ReLU == (H1, Cin) @ (Cin, TN) + bias
    h = jnp.dot(w1_ref[...], x, preferred_element_type=jnp.float32)
    h = jnp.maximum(h + b1_ref[...], 0.0)

    # net: Conv1d(H1, H2, kernel_size=1) + ReLU
    h = jnp.dot(w2_ref[...], h.astype(w2_ref.dtype), preferred_element_type=jnp.float32)
    h = jnp.maximum(h + b2_ref[...], 0.0)

    # mlr: Linear(H2, K) applied per point -> (K, TN); already the PyTorch output layout.
    out = jnp.dot(wm_ref[...], h.astype(wm_ref.dtype), preferred_element_type=jnp.float32)
    o_ref[...] = (out + bm_ref[...]).astype(o_ref.dtype)


def net_forward(x_ncl, params):
    """x_ncl: (B, Cin, N) float32 (PyTorch NCL layout). Returns (B, K, N) float32."""
    w1, b1, w2, b2, wm, bm = params  # PyTorch layouts: w* = (out, in), b* = (out,)
    B, Cin, N = x_ncl.shape
    H1 = w1.shape[0]
    H2 = w2.shape[0]
    K = wm.shape[0]

    # One-time zero-pad of the tiny input-channel dim to a sublane multiple (8).
    cin_pad = (-Cin) % 8
    if cin_pad:
        x_ncl = jnp.pad(x_ncl, ((0, 0), (0, cin_pad), (0, 0)))
        w1 = jnp.pad(w1, ((0, 0), (0, cin_pad)))
    Cp = Cin + cin_pad

    # Pad the point dim to a lane multiple (128) so all tiles / stores are lane-dense;
    # the padded tail is computed but discarded by the final slice.
    n_pad = (-N) % 128
    if n_pad:
        x_ncl = jnp.pad(x_ncl, ((0, 0), (0, 0), (0, n_pad)))
    Np = N + n_pad

    # bf16 storage for activations/weights; f32 accumulation + f32 bias adds in the kernel.
    x_bf = x_ncl.astype(jnp.bfloat16)
    w1_bf = w1.astype(jnp.bfloat16)
    w2_bf = w2.astype(jnp.bfloat16)
    wm_bf = wm.astype(jnp.bfloat16)
    b1_f = b1.reshape(H1, 1).astype(jnp.float32)
    b2_f = b2.reshape(H2, 1).astype(jnp.float32)
    bm_f = bm.reshape(K, 1).astype(jnp.float32)

    # Lane-axis (points) tile: largest power-of-two-ish divisor of Np, capped at 2048 lanes
    # (keeps live (H, TN) f32 intermediates well under v7x's 64 MiB VMEM with double buffers).
    TN = min(Np, 2048)
    while Np % TN:
        TN //= 2

    grid = (B, Np // TN)

    out = pl.pallas_call(
        pointnet_head_kernel,
        out_shape=jax.ShapeDtypeStruct((B, K, Np), jnp.float32),
        grid_spec=pltpu.PrefetchScalarGridSpec(
            num_scalar_prefetch=0,
            grid=grid,
            in_specs=[
                pl.BlockSpec((None, Cp, TN), lambda b, n: (b, 0, n)),  # per-batch point tile
                pl.BlockSpec((H1, Cp), lambda b, n: (0, 0)),           # weights: constant maps,
                pl.BlockSpec((H1, 1), lambda b, n: (0, 0)),            # stay VMEM-resident
                pl.BlockSpec((H2, H1), lambda b, n: (0, 0)),
                pl.BlockSpec((H2, 1), lambda b, n: (0, 0)),
                pl.BlockSpec((K, H2), lambda b, n: (0, 0)),
                pl.BlockSpec((K, 1), lambda b, n: (0, 0)),
            ],
            out_specs=pl.BlockSpec((None, K, TN), lambda b, n: (b, 0, n)),
        ),
        compiler_params=pltpu.CompilerParams(
            dimension_semantics=("parallel", "parallel")),
    )(x_bf, w1_bf, b1_f, w2_bf, b2_f, wm_bf, bm_f)

    if n_pad:
        out = out[:, :, :N]
    return out  # already (B, K, N): no wrapper transposes


def init_params(key, cin, h1, h2, k):
    """Weights in native PyTorch layouts: Conv1d/Linear weight = (out, in), bias = (out,)."""
    k1, k2, k3, k4, k5, k6 = jax.random.split(key, 6)
    w1 = jax.random.normal(k1, (h1, cin), jnp.float32) * 0.1   # Conv1d(cin,h1,1).weight
    b1 = jax.random.normal(k2, (h1,), jnp.float32) * 0.01      # Conv1d bias
    w2 = jax.random.normal(k3, (h2, h1), jnp.float32) * 0.1    # Conv1d(h1,h2,1).weight
    b2 = jax.random.normal(k4, (h2,), jnp.float32) * 0.01      # Conv1d bias
    wm = jax.random.normal(k5, (k, h2), jnp.float32) * 0.1     # Linear(h2,k).weight
    bm = jax.random.normal(k6, (k,), jnp.float32) * 0.01       # Linear bias
    return (w1, b1, w2, b2, wm, bm)


def reference_forward(x_ncl, params):
    """Pure-JAX f32 reference of the PyTorch semantics for verification."""
    w1, b1, w2, b2, wm, bm = params
    # net(x): Conv1d(k=1)+ReLU stacks on (B, C, N)
    h = jnp.einsum('oc,bcn->bon', w1, x_ncl) + b1.reshape(1, -1, 1)
    h = jnp.maximum(h, 0.0)
    h = jnp.einsum('oc,bcn->bon', w2, h) + b2.reshape(1, -1, 1)
    l0 = jnp.maximum(h, 0.0)                                   # (B, H2, N)
    # mlr(l0.permute(0,2,1))
    l1 = jnp.einsum('bnh,kh->bnk', jnp.transpose(l0, (0, 2, 1)), wm) + bm.reshape(1, 1, -1)
    # return l1.permute(0,2,1)
    return jnp.transpose(l1, (0, 2, 1))                        # (B, K, N)


if __name__ == "__main__":
    B, Cin, N = 2, 3, 128     # batch, input point channels (xyz), number of points
    H1, H2, K = 64, 64, 8     # hidden widths, output classes

    key = jax.random.PRNGKey(0)
    kx, kp = jax.random.split(key)
    x = jax.random.normal(kx, (B, Cin, N), jnp.float32)
    params = init_params(kp, Cin, H1, H2, K)

    out = net_forward(x, params)
    out = jax.block_until_ready(out)

    ref = reference_forward(x, params)
    assert out.shape == (B, K, N), out.shape
    # bf16 storage + f32 accumulation: compare against f32 reference at bf16-level tolerance.
    assert jnp.allclose(out, ref, atol=2e-2, rtol=2e-2), "mismatch vs reference"

    print("KERNEL_OK")
</pallas_src>

<mosaic_0001>
module attributes {stable_mosaic.version = 11 : i64} {
  func.func @pointnet_head_kernel(%arg0: i32, %arg1: i32, %arg2: memref<1x8x128xbf16, #tpu.memory_space<vmem>>, %arg3: memref<64x8xbf16, #tpu.memory_space<vmem>>, %arg4: memref<64x1xf32, #tpu.memory_space<vmem>>, %arg5: memref<64x64xbf16, #tpu.memory_space<vmem>>, %arg6: memref<64x1xf32, #tpu.memory_space<vmem>>, %arg7: memref<8x64xbf16, #tpu.memory_space<vmem>>, %arg8: memref<8x1xf32, #tpu.memory_space<vmem>>, %arg9: memref<1x8x128xf32, #tpu.memory_space<vmem>>) attributes {dimension_semantics = [#tpu.dimension_semantics<parallel>, #tpu.dimension_semantics<parallel>], iteration_bounds = array<i64: 2, 1>, scalar_prefetch = 0 : i64, scratch_operands = 0 : i64, tpu.core_type = #tpu.core_type<tc>, window_params = [{transform_indices = @transform_0, window_bounds = array<i64: 1, 8, 128>}, {pipeline_mode = #tpu.pipeline_mode<synchronous>, transform_indices = @transform_1, window_bounds = array<i64: 64, 8>}, {pipeline_mode = #tpu.pipeline_mode<synchronous>, transform_indices = @transform_2, window_bounds = array<i64: 64, 1>}, {pipeline_mode = #tpu.pipeline_mode<synchronous>, transform_indices = @transform_3, window_bounds = array<i64: 64, 64>}, {pipeline_mode = #tpu.pipeline_mode<synchronous>, transform_indices = @transform_4, window_bounds = array<i64: 64, 1>}, {pipeline_mode = #tpu.pipeline_mode<synchronous>, transform_indices = @transform_5, window_bounds = array<i64: 8, 64>}, {pipeline_mode = #tpu.pipeline_mode<synchronous>, transform_indices = @transform_6, window_bounds = array<i64: 8, 1>}, {transform_indices = @transform_7, window_bounds = array<i64: 1, 8, 128>}]} {
    %c0 = arith.constant 0 : index
    %c0_0 = arith.constant 0 : index
    %c0_1 = arith.constant 0 : index
    %0 = vector.load %arg2[%c0, %c0_0, %c0_1] : memref<1x8x128xbf16, #tpu.memory_space<vmem>>, vector<1x8x128xbf16>
    %1 = vector.shape_cast %0 : vector<1x8x128xbf16> to vector<8x128xbf16>
    %c0_2 = arith.constant 0 : index
    %c0_3 = arith.constant 0 : index
    %2 = vector.load %arg3[%c0_2, %c0_3] : memref<64x8xbf16, #tpu.memory_space<vmem>>, vector<64x8xbf16>
    %cst = arith.constant dense<0.000000e+00> : vector<64x128xf32>
    %3 = tpu.matmul %2, %1, %cst {dimension_numbers = #tpu.dot_dimension_numbers<[1], [0], [0], [1], [0, 0, 1, 1], [], []>} : vector<64x8xbf16>, vector<8x128xbf16>, vector<64x128xf32> -> vector<64x128xf32>
    %c0_4 = arith.constant 0 : index
    %c0_5 = arith.constant 0 : index
    %4 = vector.load %arg4[%c0_4, %c0_5] : memref<64x1xf32, #tpu.memory_space<vmem>>, vector<64x1xf32>
    %5 = vector.broadcast %4 : vector<64x1xf32> to vector<64x128xf32>
    %6 = arith.addf %3, %5 : vector<64x128xf32>
    %cst_6 = arith.constant 0.000000e+00 : f32
    %7 = vector.broadcast %cst_6 : f32 to vector<64x128xf32>
    %8 = arith.maximumf %6, %7 : vector<64x128xf32>
    %c0_7 = arith.constant 0 : index
    %c0_8 = arith.constant 0 : index
    %9 = vector.load %arg5[%c0_7, %c0_8] : memref<64x64xbf16, #tpu.memory_space<vmem>>, vector<64x64xbf16>
    %10 = arith.truncf %8 : vector<64x128xf32> to vector<64x128xbf16>
    %cst_9 = arith.constant dense<0.000000e+00> : vector<64x128xf32>
    %11 = tpu.matmul %9, %10, %cst_9 {dimension_numbers = #tpu.dot_dimension_numbers<[1], [0], [0], [1], [0, 0, 1, 1], [], []>} : vector<64x64xbf16>, vector<64x128xbf16>, vector<64x128xf32> -> vector<64x128xf32>
    %c0_10 = arith.constant 0 : index
    %c0_11 = arith.constant 0 : index
    %12 = vector.load %arg6[%c0_10, %c0_11] : memref<64x1xf32, #tpu.memory_space<vmem>>, vector<64x1xf32>
    %13 = vector.broadcast %12 : vector<64x1xf32> to vector<64x128xf32>
    %14 = arith.addf %11, %13 : vector<64x128xf32>
    %cst_12 = arith.constant 0.000000e+00 : f32
    %15 = vector.broadcast %cst_12 : f32 to vector<64x128xf32>
    %16 = arith.maximumf %14, %15 : vector<64x128xf32>
    %c0_13 = arith.constant 0 : index
    %c0_14 = arith.constant 0 : index
    %17 = vector.load %arg7[%c0_13, %c0_14] : memref<8x64xbf16, #tpu.memory_space<vmem>>, vector<8x64xbf16>
    %18 = arith.truncf %16 : vector<64x128xf32> to vector<64x128xbf16>
    %cst_15 = arith.constant dense<0.000000e+00> : vector<8x128xf32>
    %19 = tpu.matmul %17, %18, %cst_15 {dimension_numbers = #tpu.dot_dimension_numbers<[1], [0], [0], [1], [0, 0, 1, 1], [], []>} : vector<8x64xbf16>, vector<64x128xbf16>, vector<8x128xf32> -> vector<8x128xf32>
    %c0_16 = arith.constant 0 : index
    %c0_17 = arith.constant 0 : index
    %20 = vector.load %arg8[%c0_16, %c0_17] : memref<8x1xf32, #tpu.memory_space<vmem>>, vector<8x1xf32>
    %21 = vector.broadcast %20 : vector<8x1xf32> to vector<8x128xf32>
    %22 = arith.addf %19, %21 : vector<8x128xf32>
    %c0_18 = arith.constant 0 : index
    %c0_19 = arith.constant 0 : index
    %c0_20 = arith.constant 0 : index
    %23 = vector.load %arg9[%c0_18, %c0_19, %c0_20] : memref<1x8x128xf32, #tpu.memory_space<vmem>>, vector<1x8x128xf32>
    %24 = vector.shape_cast %23 : vector<1x8x128xf32> to vector<8x128xf32>
    %25 = vector.shape_cast %22 : vector<8x128xf32> to vector<1x8x128xf32>
    tpu.vector_store %arg9[%c0_18, %c0_19, %c0_20], %25 {strides = array<i32>} : memref<1x8x128xf32, #tpu.memory_space<vmem>>, vector<1x8x128xf32>,
    return
  }
  func.func @transform_0(%arg0: i32, %arg1: i32) -> (i32, i32, i32) {
    %c0_i32 = arith.constant 0 : i32
    %c0_i32_0 = arith.constant 0 : i32
    return %arg0, %c0_i32, %arg1 : i32, i32, i32
  }
  func.func @transform_1(%arg0: i32, %arg1: i32) -> (i32, i32) {
    %c0_i32 = arith.constant 0 : i32
    %c0_i32_0 = arith.constant 0 : i32
    %c0_i32_1 = arith.constant 0 : i32
    return %c0_i32, %c0_i32_0 : i32, i32
  }
  func.func @transform_2(%arg0: i32, %arg1: i32) -> (i32, i32) {
    %c0_i32 = arith.constant 0 : i32
    %c0_i32_0 = arith.constant 0 : i32
    %c0_i32_1 = arith.constant 0 : i32
    return %c0_i32, %c0_i32_0 : i32, i32
  }
  func.func @transform_3(%arg0: i32, %arg1: i32) -> (i32, i32) {
    %c0_i32 = arith.constant 0 : i32
    %c0_i32_0 = arith.constant 0 : i32
    %c0_i32_1 = arith.constant 0 : i32
    return %c0_i32, %c0_i32_0 : i32, i32
  }
  func.func @transform_4(%arg0: i32, %arg1: i32) -> (i32, i32) {
    %c0_i32 = arith.constant 0 : i32
    %c0_i32_0 = arith.constant 0 : i32
    %c0_i32_1 = arith.constant 0 : i32
    return %c0_i32, %c0_i32_0 : i32, i32
  }
  func.func @transform_5(%arg0: i32, %arg1: i32) -> (i32, i32) {
    %c0_i32 = arith.constant 0 : i32
    %c0_i32_0 = arith.constant 0 : i32
    %c0_i32_1 = arith.constant 0 : i32
    return %c0_i32, %c0_i32_0 : i32, i32
  }
  func.func @transform_6(%arg0: i32, %arg1: i32) -> (i32, i32) {
    %c0_i32 = arith.constant 0 : i32
    %c0_i32_0 = arith.constant 0 : i32
    %c0_i32_1 = arith.constant 0 : i32
    return %c0_i32, %c0_i32_0 : i32, i32
  }
  func.func @transform_7(%arg0: i32, %arg1: i32) -> (i32, i32, i32) {
    %c0_i32 = arith.constant 0 : i32
    %c0_i32_0 = arith.constant 0 : i32
    return %arg0, %c0_i32, %arg1 : i32, i32, i32
  }
}

</mosaic_0001>

<llo_original>
// kernel: tpu_custom_call.1
$region0: #{tpu_custom_call.1}
  #allocation0 [shape = 'u32[]', space=smem, size = 0x4, offset = 0x4, fixed_abs, tag = 'smem constant byte address 0x4 - core index']
  #allocation1 [shape = 'u32[144,128]{1,0:T(1,128)}', space=vmem, size = 0x12000, scoped, tag = 'internal scratch']
  %s0 = inlined_call_operand.vmem [shape: bf16[2,8,128], index: 0, kind: input, shape index: {}]
  %s1 = inlined_call_operand.vmem [shape: bf16[64,8], index: 1, kind: input, shape index: {}]
  %s2 = inlined_call_operand.vmem [shape: f32[64,1], index: 2, kind: input, shape index: {}]
  %s3 = inlined_call_operand.vmem [shape: bf16[64,64], index: 3, kind: input, shape index: {}]
  %s4 = inlined_call_operand.vmem [shape: f32[64,1], index: 4, kind: input, shape index: {}]
  %s5 = inlined_call_operand.vmem [shape: bf16[8,64], index: 5, kind: input, shape index: {}]
  %s6 = inlined_call_operand.vmem [shape: f32[8,1], index: 6, kind: input, shape index: {}]
  %s7 = inlined_call_operand.hbm [shape: f32[2,8,128], index: 7, kind: output, shape index: {}]
  %s8 = sld [smem:[#allocation0]]
  $region61: #{tpu_custom_call.1} parent=0
    _
  %s10 = ssub.s32 1, %s8
  %s11 = scalar_select 0, %s10, %s8
  $region1: #{tpu_custom_call.1} parent=0
    #allocation2 [shape = 'u8[8192]{0}', space=vmem, size = 0x2000, scoped, tag = 'output window, operand 0']
    #allocation3 [shape = 's32[2]{0}', space=sflag, size = 0x8, scoped, tag = 'scoped memory for tpu_custom_call.1']
    %12 = vsyncpa [#allocation3], 0
    %s13 = scalar_lea.sflag [#allocation3], 1
    %14 = vsyncpa %s13, 0
    loop: start=0, step=1, limit=4
    $region2: #{tpu_custom_call.1} parent=1 // loop_pre_header
      _
    $region3: #{tpu_custom_call.1} parent=1 // loop_header
      %s16 = sphi 0, %s20
      %p17 = scmp.ge.s32.totalorder %s16, 4
      %s23 = sphi 0, %s35
      %s24 = sphi 0, %s31
      %s25 = sphi 0, %s23
      %s26 = sphi 0, %s24
      %s27 = sphi 0, %s25
      %s28 = sphi 0, %s26
      %s40 = sphi 0, %s42
      %s43 = sphi 0, %s40
      %s44 = sphi 0, %s43
      %s60 = sphi 0, %s44
      %s64 = sphi 0, %s64
      %s66 = sphi 0, %s64
      %s67 = sphi 0, %s66
      %s81 = sphi 0, %s67
      %s85 = sphi 0, %s85
      %s87 = sphi 0, %s85
      %s88 = sphi 0, %s87
      %s102 = sphi 0, %s88
      %s106 = sphi 0, %s106
      %s108 = sphi 0, %s106
      %s109 = sphi 0, %s108
      %s123 = sphi 0, %s109
      %s127 = sphi 0, %s127
      %s129 = sphi 0, %s127
      %s130 = sphi 0, %s129
      %s144 = sphi 0, %s130
      %s148 = sphi 0, %s148
      %s150 = sphi 0, %s148
      %s151 = sphi 0, %s150
      %s165 = sphi 0, %s151
      %s169 = sphi 0, %s169
      %s171 = sphi 0, %s169
      %s172 = sphi 0, %s171
      %s186 = sphi 0, %s172
      %s194 = sphi 0, %s196
      %s197 = sphi 0, %s194
      %s198 = sphi 0, %s197
      %s214 = sphi 0, %s198
    $region4: #{tpu_custom_call.1} parent=1 // loop_header_branch
      %19 = sbr.rel (%p17) target = $region8
    $region5: #{tpu_custom_call.1} parent=1 // loop_body
      %s21 = ssub.s32 %s16, 1
      %s22 = ssub.s32 %s16, 2
      %s29 = sadd.s32 1, %s24
      %p30 = scmp.ge.s32.totalorder %s29, 1
      %s31 = scalar_select %p30, 0, %s29
      %s32 = sadd.s32 1, %s23
      %s33 = scalar_select %p30, %s32, %s23
      %p34 = scmp.ge.s32.totalorder %s33, 2
      %s35 = scalar_select %p34, 0, %s33
      %s36 = ssub.s32 %s23, %s35
      %s37 = ssub.s32 %s24, %s31
      %s38 = sor.u32 %s36, %s37
      %p39 = scmp.eq.s32.totalorder %s38, 0
      %s41 = sadd.s32 %s40, 1
      %s42 = scalar_select %p39, %s40, %s41
      %p45 = pneg %p39
      %p46 = scmp.eq.s32.totalorder %s16, 1
      %p47 = por %p45, %p46
      %p48 = scmp.ne.s32.totalorder %s40, %s43
      %p49 = scmp.eq.s32.totalorder %s16, 0
      %p50 = por %p48, %p49
      %p51 = scmp.ne.s32.totalorder %s40, %s43
      %p52 = scmp.eq.s32.totalorder %s21, 1
      %p53 = por %p51, %p52
      %p54 = scmp.ne.s32.totalorder %s43, %s44
      %p55 = scmp.eq.s32.totalorder %s21, 0
      %p56 = por %p54, %p55
      %p57 = scmp.ne.s32.totalorder %s43, %s44
      %p58 = scmp.eq.s32.totalorder %s22, 1
      %p59 = por %p57, %p58
      %p61 = scmp.ne.s32.totalorder %s44, %s60
      %p62 = scmp.eq.s32.totalorder %s22, 0
      %p63 = por %p61, %p62
      %s65 = sadd.s32 %s64, 1
      %p68 = scmp.eq.s32.totalorder %s16, 1
      %p69 = scmp.ne.s32.totalorder %s64, %s66
      %p70 = scmp.eq.s32.totalorder %s16, 0
      %p71 = por %p69, %p70
      %p72 = scmp.ne.s32.totalorder %s64, %s66
      %p73 = scmp.eq.s32.totalorder %s21, 1
      %p74 = por %p72, %p73
      %p75 = scmp.ne.s32.totalorder %s66, %s67
      %p76 = scmp.eq.s32.totalorder %s21, 0
      %p77 = por %p75, %p76
      %p78 = scmp.ne.s32.totalorder %s66, %s67
      %p79 = scmp.eq.s32.totalorder %s22, 1
      %p80 = por %p78, %p79
      %p82 = scmp.ne.s32.totalorder %s67, %s81
      %p83 = scmp.eq.s32.totalorder %s22, 0
      %p84 = por %p82, %p83
      %s86 = sadd.s32 %s85, 1
      %p89 = scmp.eq.s32.totalorder %s16, 1
      %p90 = scmp.ne.s32.totalorder %s85, %s87
      %p91 = scmp.eq.s32.totalorder %s16, 0
      %p92 = por %p90, %p91
      %p93 = scmp.ne.s32.totalorder %s85, %s87
      %p94 = scmp.eq.s32.totalorder %s21, 1
      %p95 = por %p93, %p94
      %p96 = scmp.ne.s32.totalorder %s87, %s88
      %p97 = scmp.eq.s32.totalorder %s21, 0
      %p98 = por %p96, %p97
      %p99 = scmp.ne.s32.totalorder %s87, %s88
      %p100 = scmp.eq.s32.totalorder %s22, 1
      %p101 = por %p99, %p100
      %p103 = scmp.ne.s32.totalorder %s88, %s102
      %p104 = scmp.eq.s32.totalorder %s22, 0
      %p105 = por %p103, %p104
      %s107 = sadd.s32 %s106, 1
      %p110 = scmp.eq.s32.totalorder %s16, 1
      %p111 = scmp.ne.s32.totalorder %s106, %s108
      %p112 = scmp.eq.s32.totalorder %s16, 0
      %p113 = por %p111, %p112
      %p114 = scmp.ne.s32.totalorder %s106, %s108
      %p115 = scmp.eq.s32.totalorder %s21, 1
      %p116 = por %p114, %p115
      %p117 = scmp.ne.s32.totalorder %s108, %s109
      %p118 = scmp.eq.s32.totalorder %s21, 0
      %p119 = por %p117, %p118
      %p120 = scmp.ne.s32.totalorder %s108, %s109
      %p121 = scmp.eq.s32.totalorder %s22, 1
      %p122 = por %p120, %p121
      %p124 = scmp.ne.s32.totalorder %s109, %s123
      %p125 = scmp.eq.s32.totalorder %s22, 0
      %p126 = por %p124, %p125
      %s128 = sadd.s32 %s127, 1
      %p131 = scmp.eq.s32.totalorder %s16, 1
      %p132 = scmp.ne.s32.totalorder %s127, %s129
      %p133 = scmp.eq.s32.totalorder %s16, 0
      %p134 = por %p132, %p133
      %p135 = scmp.ne.s32.totalorder %s127, %s129
      %p136 = scmp.eq.s32.totalorder %s21, 1
      %p137 = por %p135, %p136
      %p138 = scmp.ne.s32.totalorder %s129, %s130
      %p139 = scmp.eq.s32.totalorder %s21, 0
      %p140 = por %p138, %p139
      %p141 = scmp.ne.s32.totalorder %s129, %s130
      %p142 = scmp.eq.s32.totalorder %s22, 1
      %p143 = por %p141, %p142
      %p145 = scmp.ne.s32.totalorder %s130, %s144
      %p146 = scmp.eq.s32.totalorder %s22, 0
      %p147 = por %p145, %p146
      %s149 = sadd.s32 %s148, 1
      %p152 = scmp.eq.s32.totalorder %s16, 1
      %p153 = scmp.ne.s32.totalorder %s148, %s150
      %p154 = scmp.eq.s32.totalorder %s16, 0
      %p155 = por %p153, %p154
      %p156 = scmp.ne.s32.totalorder %s148, %s150
      %p157 = scmp.eq.s32.totalorder %s21, 1
      %p158 = por %p156, %p157
      %p159 = scmp.ne.s32.totalorder %s150, %s151
      %p160 = scmp.eq.s32.totalorder %s21, 0
      %p161 = por %p159, %p160
      %p162 = scmp.ne.s32.totalorder %s150, %s151
      %p163 = scmp.eq.s32.totalorder %s22, 1
      %p164 = por %p162, %p163
      %p166 = scmp.ne.s32.totalorder %s151, %s165
      %p167 = scmp.eq.s32.totalorder %s22, 0
      %p168 = por %p166, %p167
      %s170 = sadd.s32 %s169, 1
      %p173 = scmp.eq.s32.totalorder %s16, 1
      %p174 = scmp.ne.s32.totalorder %s169, %s171
      %p175 = scmp.eq.s32.totalorder %s16, 0
      %p176 = por %p174, %p175
      %p177 = scmp.ne.s32.totalorder %s169, %s171
      %p178 = scmp.eq.s32.totalorder %s21, 1
      %p179 = por %p177, %p178
      %p180 = scmp.ne.s32.totalorder %s171, %s172
      %p181 = scmp.eq.s32.totalorder %s21, 0
      %p182 = por %p180, %p181
      %p183 = scmp.ne.s32.totalorder %s171, %s172
      %p184 = scmp.eq.s32.totalorder %s22, 1
      %p185 = por %p183, %p184
      %p187 = scmp.ne.s32.totalorder %s172, %s186
      %p188 = scmp.eq.s32.totalorder %s22, 0
      %p189 = por %p187, %p188
      %s190 = ssub.s32 %s23, %s35
      %s191 = ssub.s32 %s24, %s31
      %s192 = sor.u32 %s190, %s191
      %p193 = scmp.eq.s32.totalorder %s192, 0
      %s195 = sadd.s32 %s194, 1
      %s196 = scalar_select %p193, %s194, %s195
      %p199 = pneg %p193
      %p200 = scmp.eq.s32.totalorder %s16, 1
      %p201 = por %p199, %p200
      %p202 = scmp.ne.s32.totalorder %s194, %s197
      %p203 = scmp.eq.s32.totalorder %s16, 0
      %p204 = por %p202, %p203
      %p205 = scmp.ne.s32.totalorder %s194, %s197
      %p206 = scmp.eq.s32.totalorder %s21, 1
      %p207 = por %p205, %p206
      %p208 = scmp.ne.s32.totalorder %s197, %s198
      %p209 = scmp.eq.s32.totalorder %s21, 0
      %p210 = por %p208, %p209
      %p211 = scmp.ne.s32.totalorder %s197, %s198
      %p212 = scmp.eq.s32.totalorder %s22, 1
      %p213 = por %p211, %p212
      %p215 = scmp.ne.s32.totalorder %s198, %s214
      %p216 = scmp.eq.s32.totalorder %s22, 0
      %p217 = por %p215, %p216
      %p218 = scmp.le.s32.totalorder 1, %s16
      %p219 = scmp.lt.s32.totalorder %s16, 3
      %p220 = pnand %p218, %p219
      %p221 = pneg %p220
      // Predicated region
      $region9: #{tpu_custom_call.1} parent=5 // pred_check
        _
      $region10: #{tpu_custom_call.1} parent=5 // pred_check_branch
        %223 = sbr.rel (%p220) target = $region12
      $region11: #{tpu_custom_call.1} parent=5 // pred_region
        %s224 = ssub.s32 %s16, 1
        // Predicated region
        $region13: #{tpu_custom_call.1} parent=11 // pred_check
          %p225 = pneg %p77
        $region14: #{tpu_custom_call.1} parent=11 // pred_check_branch
          %227 = sbr.rel (%p225) target = $region16
        $region15: #{tpu_custom_call.1} parent=11 // pred_region
          _
        $region16: #{tpu_custom_call.1} parent=11 // pred_fallthru
          _
        // Predicated region
        $region17: #{tpu_custom_call.1} parent=11 // pred_check
          %p228 = pneg %p98
        $region18: #{tpu_custom_call.1} parent=11 // pred_check_branch
          %230 = sbr.rel (%p228) target = $region20
        $region19: #{tpu_custom_call.1} parent=11 // pred_region
          _
        $region20: #{tpu_custom_call.1} parent=11 // pred_fallthru
          _
        // Predicated region
        $region21: #{tpu_custom_call.1} parent=11 // pred_check
          %p231 = pneg %p119
        $region22: #{tpu_custom_call.1} parent=11 // pred_check_branch
          %233 = sbr.rel (%p231) target = $region24
        $region23: #{tpu_custom_call.1} parent=11 // pred_region
          _
        $region24: #{tpu_custom_call.1} parent=11 // pred_fallthru
          _
        // Predicated region
        $region25: #{tpu_custom_call.1} parent=11 // pred_check
          %p234 = pneg %p140
        $region26: #{tpu_custom_call.1} parent=11 // pred_check_branch
          %236 = sbr.rel (%p234) target = $region28
        $region27: #{tpu_custom_call.1} parent=11 // pred_region
          _
        $region28: #{tpu_custom_call.1} parent=11 // pred_fallthru
          _
        // Predicated region
        $region29: #{tpu_custom_call.1} parent=11 // pred_check
          %p237 = pneg %p161
        $region30: #{tpu_custom_call.1} parent=11 // pred_check_branch
          %239 = sbr.rel (%p237) target = $region32
        $region31: #{tpu_custom_call.1} parent=11 // pred_region
          _
        $region32: #{tpu_custom_call.1} parent=11 // pred_fallthru
          _
        // Predicated region
        $region33: #{tpu_custom_call.1} parent=11 // pred_check
          %p240 = pneg %p182
        $region34: #{tpu_custom_call.1} parent=11 // pred_check_branch
          %242 = sbr.rel (%p240) target = $region36
        $region35: #{tpu_custom_call.1} parent=11 // pred_region
          _
        $region36: #{tpu_custom_call.1} parent=11 // pred_fallthru
          _
      $region12: #{tpu_custom_call.1} parent=5 // pred_fallthru
        _
      %p243 = scmp.lt.s32.totalorder %s16, 2
      // Predicated region
      $region37: #{tpu_custom_call.1} parent=5 // pred_check
        %p244 = pneg %p243
      $region38: #{tpu_custom_call.1} parent=5 // pred_check_branch
        %246 = sbr.rel (%p244) target = $region40
      $region39: #{tpu_custom_call.1} parent=5 // pred_region
        // Predicated region
        $region41: #{tpu_custom_call.1} parent=39 // pred_check
          %p247 = pneg %p50
        $region42: #{tpu_custom_call.1} parent=39 // pred_check_branch
          %249 = sbr.rel (%p247) target = $region44
        $region43: #{tpu_custom_call.1} parent=39 // pred_region
          %p250 = scmp.lt.s32.totalorder %s23, 1
          %s251 = scalar_select %p250, %s23, 1
          %p252 = scmp.lt.s32.totalorder %s24, 0
          %s253 = scalar_select %p252, %s24, 0
          %s254 = sadd.s32 %s253, %s251
          %s255 = smul.addr %s254, 4
          %s256 = scalar_lea.vmem %s0, %s255
        $region44: #{tpu_custom_call.1} parent=39 // pred_fallthru
          _
      $region40: #{tpu_custom_call.1} parent=5 // pred_fallthru
        _
      %p257 = scmp.le.s32.totalorder 1, %s16
      %p258 = scmp.lt.s32.totalorder %s16, 3
      %p259 = pnand %p257, %p258
      %p260 = pneg %p259
      // Predicated region
      $region45: #{tpu_custom_call.1} parent=5 // pred_check
        _
      $region46: #{tpu_custom_call.1} parent=5 // pred_check_branch
        %262 = sbr.rel (%p259) target = $region48
      $region47: #{tpu_custom_call.1} parent=5 // pred_region
        %s263 = ssub.s32 %s16, 1
        %p264 = scmp.lt.s32.totalorder %s25, 1
        %s265 = scalar_select %p264, %s25, 1
        %p266 = scmp.lt.s32.totalorder %s26, 0
        %s267 = scalar_select %p266, %s26, 0
        %s268 = sadd.s32 %s267, %s265
        %s269 = smul.addr %s268, 4
        %s270 = scalar_lea.vmem %s0, %s269
        %p271 = pneg %p56
        %p272 = pneg %p53
        %p273 = pneg %p77
        %p274 = pneg %p74
        %p275 = pneg %p98
        %p276 = pneg %p95
        %p277 = pneg %p119
        %p278 = pneg %p116
        %p279 = pneg %p140
        %p280 = pneg %p137
        %p281 = pneg %p161
        %p282 = pneg %p158
        %p283 = pneg %p182
        %p284 = pneg %p179
        %p285 = pneg %p210
        %p286 = pneg %p207
        %s287 = sand.u32 %s197, 1
        %s288 = scalar_lea.sflag [#allocation3], %s287
        %s289 = sand.u32 %s197, 1
        %s290 = smul.addr %s289, 8
        %s291 = scalar_lea.vmem [#allocation2], %s290
        %p292 = scmp.lt.s32.totalorder %s25, 1
        %s293 = scalar_select %p292, %s25, 1
        %p294 = scmp.lt.s32.totalorder %s26, 0
        %s295 = scalar_select %p294, %s26, 0
        %s296 = sadd.s32 %s295, %s293
        %s297 = smul.addr %s296, 4
        %s298 = scalar_lea.vmem %s0, %s297
        %v300 = vld [vmem:[%s298] sm:$0xf]
        %v301 = vld [vmem:[%s1] sm:$0xf]
        %v302 = vld [vmem:[%s1 + $0x4] sm:$0xf]
        %v303 = vld [vmem:[%s1 + $0x8] sm:$0xf]
        %v304 = vld [vmem:[%s1 + $0xc] sm:$0xf]
        %v305 = vld [vmem:[%s1 + $0x10] sm:$0xf]
        %v306 = vld [vmem:[%s1 + $0x14] sm:$0xf]
        %v307 = vld [vmem:[%s1 + $0x18] sm:$0xf]
        %v308 = vld [vmem:[%s1 + $0x1c] sm:$0xf]
        %v309 = vld [vmem:[%s2] sm:$0xff]
        %v310 = vld [vmem:[%s2 + $0x8] sm:$0xff]
        %v311 = vld [vmem:[%s2 + $0x10] sm:$0xff]
        %v312 = vld [vmem:[%s2 + $0x18] sm:$0xff]
        %v313 = vld [vmem:[%s2 + $0x20] sm:$0xff]
        %v314 = vld [vmem:[%s2 + $0x28] sm:$0xff]
        %v315 = vld [vmem:[%s2 + $0x30] sm:$0xff]
        %v316 = vld [vmem:[%s2 + $0x38] sm:$0xff]
        %318 = vset.pattern.permute.xlu0 0
        %319 = vperm.xlu0 %318, %v309
        %v320 = vpop.permute.xlu0 %319
        %323 = vset.pattern.permute.xlu0 0
        %324 = vperm.xlu0 %323, %v310
        %v325 = vpop.permute.xlu0 %324
        %328 = vset.pattern.permute.xlu0 0
        %329 = vperm.xlu0 %328, %v311
        %v330 = vpop.permute.xlu0 %329
        %333 = vset.pattern.permute.xlu0 0
        %334 = vperm.xlu0 %333, %v312
        %v335 = vpop.permute.xlu0 %334
        %338 = vset.pattern.permute.xlu0 0
        %339 = vperm.xlu0 %338, %v313
        %v340 = vpop.permute.xlu0 %339
        %343 = vset.pattern.permute.xlu0 0
        %344 = vperm.xlu0 %343, %v314
        %v345 = vpop.permute.xlu0 %344
        %348 = vset.pattern.permute.xlu0 0
        %349 = vperm.xlu0 %348, %v315
        %v350 = vpop.permute.xlu0 %349
        %353 = vset.pattern.permute.xlu0 0
        %354 = vperm.xlu0 %353, %v316
        %v355 = vpop.permute.xlu0 %354
        %v365 = vunpack.c.l.b16 %v301
        %v366 = vunpack.c.l.b16 %v302
        %v367 = vunpack.c.l.b16 %v303
        %v368 = vunpack.c.l.b16 %v304
        %v369 = vunpack.c.l.b16 %v305
        %v370 = vunpack.c.l.b16 %v306
        %v371 = vunpack.c.l.b16 %v307
        %v372 = vunpack.c.l.b16 %v308
        %v373 = vpack.c.b16 %v366, %v365
        %v374 = vpack.c.b16 %v368, %v367
        %v375 = vpack.c.b16 %v370, %v369
        %v376 = vpack.c.b16 %v372, %v371
        %vm377 = vcmask 64512
        %v379 = vsel %vm377, %v373, 0
        %v382 = vsel %vm377, %v374, 0
        %v385 = vsel %vm377, %v375, 0
        %v388 = vsel %vm377, %v376, 0
        %vm390 = vcmask 1043456
        %v392 = vsel %vm390, %v300, 0
        %394 = vmatprep.subr.bf16.mxu0 0
        %395 = vmatpush1.bf16.msra.mxu0 %v392
        %396 = vmatprep.subr.bf16.mxu0 0
        %397 = vmatpush1.bf16.msra.mxu0 0
        %398 = vmatprep.subr.bf16.mxu0 0
        %399 = vmatpush1.bf16.msra.mxu0 0
        %400 = vmatprep.subr.bf16.mxu0 0
        %401 = vmatpush1.bf16.msra.mxu0 0
        %402 = vmatprep.subr.bf16.mxu0 0
        %403 = vmatpush1.bf16.msra.mxu0 0
        %404 = vmatprep.subr.bf16.mxu0 0
        %405 = vmatpush1.bf16.msra.mxu0 0
        %406 = vmatprep.subr.bf16.mxu0 0
        %407 = vmatpush1.bf16.msra.mxu0 0
        %408 = vmatprep.subr.bf16.mxu0 0
        %409 = vmatpush1.bf16.msra.mxu0 0
        %410 = vmatprep.subr.bf16.mxu0 0
        %411 = vmatpush1.bf16.msra.mxu0 0
        %412 = vmatprep.subr.bf16.mxu0 0
        %413 = vmatpush1.bf16.msra.mxu0 0
        %414 = vmatprep.subr.bf16.mxu0 0
        %415 = vmatpush1.bf16.msra.mxu0 0
        %416 = vmatprep.subr.bf16.mxu0 0
        %417 = vmatpush1.bf16.msra.mxu0 0
        %418 = vmatprep.subr.bf16.mxu0 0
        %419 = vmatpush1.bf16.msra.mxu0 0
        %420 = vmatprep.subr.bf16.mxu0 0
        %421 = vmatpush1.bf16.msra.mxu0 0
        %422 = vmatprep.subr.bf16.mxu0 0
        %423 = vmatpush1.bf16.msra.mxu0 0
        %424 = vmatprep.subr.bf16.mxu0 0
        %425 = vmatpush1.bf16.msra.mxu0 0
        %426 = vmatprep.mubr.bf16.mxu0 0
        %427 = vmatmul.mubr.bf16.gmra.mrb[0].mxu0 %v379
        %v428 = vpop.f32.mrb[0].mxu0
        %v429 = vadd.f32 %v320, %v428
        %v430 = vpop.f32.mrb[0].mxu0
        %v431 = vpop.f32.mrb[0].mxu0
        %v432 = vadd.f32 %v325, %v431
        %v433 = vpop.f32.mrb[0].mxu0
        %434 = vmatprep.mubr.bf16.mxu0 0
        %435 = vmatmul.mubr.bf16.gmra.mrb[0].mxu0 %v382
        %v436 = vpop.f32.mrb[0].mxu0
        %v437 = vadd.f32 %v330, %v436
        %v438 = vpop.f32.mrb[0].mxu0
        %v439 = vpop.f32.mrb[0].mxu0
        %v440 = vadd.f32 %v335, %v439
        %v441 = vpop.f32.mrb[0].mxu0
        %442 = vmatprep.mubr.bf16.mxu0 0
        %443 = vmatmul.mubr.bf16.gmra.mrb[0].mxu0 %v385
        %v444 = vpop.f32.mrb[0].mxu0
        %v445 = vadd.f32 %v340, %v444
        %v446 = vpop.f32.mrb[0].mxu0
        %v447 = vpop.f32.mrb[0].mxu0
        %v448 = vadd.f32 %v345, %v447
        %v449 = vpop.f32.mrb[0].mxu0
        %450 = vmatprep.mubr.bf16.mxu0 0
        %451 = vmatmul.mubr.bf16.gmra.mrb[0].mxu0 %v388
        %v452 = vpop.f32.mrb[0].mxu0
        %v453 = vadd.f32 %v350, %v452
        %v454 = vpop.f32.mrb[0].mxu0
        %v455 = vpop.f32.mrb[0].mxu0
        %v456 = vadd.f32 %v355, %v455
        %v457 = vpop.f32.mrb[0].mxu0
        %458 = vdwg.mxu0
        %v459 = vmax.f32 %v429, 0.0
        %v460 = vmax.f32 %v432, 0.0
        %v461 = vmax.f32 %v437, 0.0
        %v462 = vmax.f32 %v440, 0.0
        %v463 = vmax.f32 %v445, 0.0
        %v464 = vmax.f32 %v448, 0.0
        %v465 = vmax.f32 %v453, 0.0
        %v466 = vmax.f32 %v456, 0.0
        %v467 = vld [vmem:[%s3] sm:$0xf]
        %v468 = vld [vmem:[%s3 + $0x4] sm:$0xf]
        %v469 = vld [vmem:[%s3 + $0x8] sm:$0xf]
        %v470 = vld [vmem:[%s3 + $0xc] sm:$0xf]
        %v471 = vld [vmem:[%s3 + $0x10] sm:$0xf]
        %v472 = vld [vmem:[%s3 + $0x14] sm:$0xf]
        %v473 = vld [vmem:[%s3 + $0x18] sm:$0xf]
        %v474 = vld [vmem:[%s3 + $0x1c] sm:$0xf]
        %v475 = vpack.c.bf16 %v460, %v459
        %v476 = vpack.c.bf16 %v462, %v461
        %v477 = vpack.c.bf16 %v464, %v463
        %v478 = vpack.c.bf16 %v466, %v465
        %v479 = vld [vmem:[%s4] sm:$0xff]
        %v480 = vld [vmem:[%s4 + $0x8] sm:$0xff]
        %v481 = vld [vmem:[%s4 + $0x10] sm:$0xff]
        %v482 = vld [vmem:[%s4 + $0x18] sm:$0xff]
        %v483 = vld [vmem:[%s4 + $0x20] sm:$0xff]
        %v484 = vld [vmem:[%s4 + $0x28] sm:$0xff]
        %v485 = vld [vmem:[%s4 + $0x30] sm:$0xff]
        %v486 = vld [vmem:[%s4 + $0x38] sm:$0xff]
        %488 = vset.pattern.permute.xlu0 0
        %489 = vperm.xlu0 %488, %v479
        %v490 = vpop.permute.xlu0 %489
        %493 = vset.pattern.permute.xlu0 0
        %494 = vperm.xlu0 %493, %v480
        %v495 = vpop.permute.xlu0 %494
        %498 = vset.pattern.permute.xlu0 0
        %499 = vperm.xlu0 %498, %v481
        %v500 = vpop.permute.xlu0 %499
        %503 = vset.pattern.permute.xlu0 0
        %504 = vperm.xlu0 %503, %v482
        %v505 = vpop.permute.xlu0 %504
        %508 = vset.pattern.permute.xlu0 0
        %509 = vperm.xlu0 %508, %v483
        %v510 = vpop.permute.xlu0 %509
        %513 = vset.pattern.permute.xlu0 0
        %514 = vperm.xlu0 %513, %v484
        %v515 = vpop.permute.xlu0 %514
        %518 = vset.pattern.permute.xlu0 0
        %519 = vperm.xlu0 %518, %v485
        %v520 = vpop.permute.xlu0 %519
        %523 = vset.pattern.permute.xlu0 0
        %524 = vperm.xlu0 %523, %v486
        %v525 = vpop.permute.xlu0 %524
        %v535 = vunpack.c.l.b16 %v467
        %v536 = vunpack.c.l.b16 %v468
        %v537 = vunpack.c.l.b16 %v469
        %v538 = vunpack.c.l.b16 %v470
        %v539 = vunpack.c.l.b16 %v471
        %v540 = vunpack.c.l.b16 %v472
        %v541 = vunpack.c.l.b16 %v473
        %v542 = vunpack.c.l.b16 %v474
        %v543 = vpack.c.b16 %v536, %v535
        %v544 = vpack.c.b16 %v538, %v537
        %v545 = vpack.c.b16 %v540, %v539
        %v546 = vpack.c.b16 %v542, %v541
        %vm547 = vcmask 523264
        %v549 = vsel %vm547, %v543, 0
        %v552 = vsel %vm547, %v544, 0
        %v555 = vsel %vm547, %v545, 0
        %v558 = vsel %vm547, %v546, 0
        %560 = vmatprep.subr.bf16.mxu0 0
        %561 = vmatpush1.bf16.msra.mxu0 %v475
        %562 = vmatprep.subr.bf16.mxu0 0
        %563 = vmatpush1.bf16.msra.mxu0 %v476
        %564 = vmatprep.subr.bf16.mxu0 0
        %565 = vmatpush1.bf16.msra.mxu0 %v477
        %566 = vmatprep.subr.bf16.mxu0 0
        %567 = vmatpush1.bf16.msra.mxu0 %v478
        %568 = vmatprep.subr.bf16.mxu0 0
        %569 = vmatpush1.bf16.msra.mxu0 0
        %570 = vmatprep.subr.bf16.mxu0 0
        %571 = vmatpush1.bf16.msra.mxu0 0
        %572 = vmatprep.subr.bf16.mxu0 0
        %573 = vmatpush1.bf16.msra.mxu0 0
        %574 = vmatprep.subr.bf16.mxu0 0
        %575 = vmatpush1.bf16.msra.mxu0 0
        %576 = vmatprep.subr.bf16.mxu0 0
        %577 = vmatpush1.bf16.msra.mxu0 0
        %578 = vmatprep.subr.bf16.mxu0 0
        %579 = vmatpush1.bf16.msra.mxu0 0
        %580 = vmatprep.subr.bf16.mxu0 0
        %581 = vmatpush1.bf16.msra.mxu0 0
        %582 = vmatprep.subr.bf16.mxu0 0
        %583 = vmatpush1.bf16.msra.mxu0 0
        %584 = vmatprep.subr.bf16.mxu0 0
        %585 = vmatpush1.bf16.msra.mxu0 0
        %586 = vmatprep.subr.bf16.mxu0 0
        %587 = vmatpush1.bf16.msra.mxu0 0
        %588 = vmatprep.subr.bf16.mxu0 0
        %589 = vmatpush1.bf16.msra.mxu0 0
        %590 = vmatprep.subr.bf16.mxu0 0
        %591 = vmatpush1.bf16.msra.mxu0 0
        %592 = vmatprep.mubr.bf16.mxu0 0
        %593 = vmatmul.mubr.bf16.gmra.mrb[0].mxu0 %v549
        %v594 = vpop.f32.mrb[0].mxu0
        %v595 = vadd.f32 %v490, %v594
        %v596 = vpop.f32.mrb[0].mxu0
        %v597 = vpop.f32.mrb[0].mxu0
        %v598 = vadd.f32 %v495, %v597
        %v599 = vpop.f32.mrb[0].mxu0
        %600 = vmatprep.mubr.bf16.mxu0 0
        %601 = vmatmul.mubr.bf16.gmra.mrb[0].mxu0 %v552
        %v602 = vpop.f32.mrb[0].mxu0
        %v603 = vadd.f32 %v500, %v602
        %v604 = vpop.f32.mrb[0].mxu0
        %v605 = vpop.f32.mrb[0].mxu0
        %v606 = vadd.f32 %v505, %v605
        %v607 = vpop.f32.mrb[0].mxu0
        %608 = vmatprep.mubr.bf16.mxu0 0
        %609 = vmatmul.mubr.bf16.gmra.mrb[0].mxu0 %v555
        %v610 = vpop.f32.mrb[0].mxu0
        %v611 = vadd.f32 %v510, %v610
        %v612 = vpop.f32.mrb[0].mxu0
        %v613 = vpop.f32.mrb[0].mxu0
        %v614 = vadd.f32 %v515, %v613
        %v615 = vpop.f32.mrb[0].mxu0
        %616 = vmatprep.mubr.bf16.mxu0 0
        %617 = vmatmul.mubr.bf16.gmra.mrb[0].mxu0 %v558
        %v618 = vpop.f32.mrb[0].mxu0
        %v619 = vadd.f32 %v520, %v618
        %v620 = vpop.f32.mrb[0].mxu0
        %v621 = vpop.f32.mrb[0].mxu0
        %v622 = vadd.f32 %v525, %v621
        %v623 = vpop.f32.mrb[0].mxu0
        %624 = vdwg.mxu0
        %v625 = vmax.f32 %v595, 0.0
        %v626 = vmax.f32 %v598, 0.0
        %v627 = vmax.f32 %v603, 0.0
        %v628 = vmax.f32 %v606, 0.0
        %v629 = vmax.f32 %v611, 0.0
        %v630 = vmax.f32 %v614, 0.0
        %v631 = vmax.f32 %v619, 0.0
        %v632 = vmax.f32 %v622, 0.0
        %v633 = vld [vmem:[%s5] sm:$0xf]
        %v634 = vpack.c.bf16 %v626, %v625
        %v635 = vpack.c.bf16 %v628, %v627
        %v636 = vpack.c.bf16 %v630, %v629
        %v637 = vpack.c.bf16 %v632, %v631
        %v638 = vld [vmem:[%s6] sm:$0xff]
        %640 = vset.pattern.permute.xlu0 0
        %641 = vperm.xlu0 %640, %v638
        %v642 = vpop.permute.xlu0 %641
        %v645 = vsel %vm547, %v633, 0
        %647 = vmatprep.subr.bf16.mxu0 0
        %648 = vmatpush1.bf16.msra.mxu0 %v634
        %649 = vmatprep.subr.bf16.mxu0 0
        %650 = vmatpush1.bf16.msra.mxu0 %v635
        %651 = vmatprep.subr.bf16.mxu0 0
        %652 = vmatpush1.bf16.msra.mxu0 %v636
        %653 = vmatprep.subr.bf16.mxu0 0
        %654 = vmatpush1.bf16.msra.mxu0 %v637
        %655 = vmatprep.subr.bf16.mxu0 0
        %656 = vmatpush1.bf16.msra.mxu0 0
        %657 = vmatprep.subr.bf16.mxu0 0
        %658 = vmatpush1.bf16.msra.mxu0 0
        %659 = vmatprep.subr.bf16.mxu0 0
        %660 = vmatpush1.bf16.msra.mxu0 0
        %661 = vmatprep.subr.bf16.mxu0 0
        %662 = vmatpush1.bf16.msra.mxu0 0
        %663 = vmatprep.subr.bf16.mxu0 0
        %664 = vmatpush1.bf16.msra.mxu0 0
        %665 = vmatprep.subr.bf16.mxu0 0
        %666 = vmatpush1.bf16.msra.mxu0 0
        %667 = vmatprep.subr.bf16.mxu0 0
        %668 = vmatpush1.bf16.msra.mxu0 0
        %669 = vmatprep.subr.bf16.mxu0 0
        %670 = vmatpush1.bf16.msra.mxu0 0
        %671 = vmatprep.subr.bf16.mxu0 0
        %672 = vmatpush1.bf16.msra.mxu0 0
        %673 = vmatprep.subr.bf16.mxu0 0
        %674 = vmatpush1.bf16.msra.mxu0 0
        %675 = vmatprep.subr.bf16.mxu0 0
        %676 = vmatpush1.bf16.msra.mxu0 0
        %677 = vmatprep.subr.bf16.mxu0 0
        %678 = vmatpush1.bf16.msra.mxu0 0
        %679 = vmatprep.mubr.bf16.mxu0 0
        %680 = vmatmul.mubr.bf16.gmra.mrb[0].mxu0 %v645
        %v681 = vpop.f32.mrb[0].mxu0
        %v682 = vadd.f32 %v642, %v681
        %v683 = vpop.f32.mrb[0].mxu0
        %v684 = vpop.f32.mrb[0].mxu0
        %v685 = vpop.f32.mrb[0].mxu0
        %686 = vdwg.mxu0
        %687 = vst [vmem:[%s291] sm:$0xff] %v682
        %s688 = sand.u32 %s197, 1
        %s689 = scalar_lea.sflag [#allocation3], %s688
        %s690 = sand.u32 %s197, 1
        %s691 = smul.addr %s690, 8
        %s692 = scalar_lea.vmem [#allocation2], %s691
        // Predicated region
        $region49: #{tpu_custom_call.1} parent=47 // pred_check
          %p693 = pneg %p207
        $region50: #{tpu_custom_call.1} parent=47 // pred_check_branch
          %695 = sbr.rel (%p693) target = $region52
        $region51: #{tpu_custom_call.1} parent=47 // pred_region
          %s697 = ssub.s32 128, 128
          %698 = vsyncadd %s689, %s697
          %s699 = sadd.s32 %s26, %s25
          %s700 = smul.addr %s699, 128
          %s701 = scalar_lea.hbm %s7, %s700
          %s703 = sshll.u32 %s692, 4
          %s704 = int_to_ptr.vmem [resolvable:$true] %s703
          %706 = dma.vmem_to_hbm [thread:$0]  %s704, 128, %s701, %s689
        $region52: #{tpu_custom_call.1} parent=47 // pred_fallthru
          _
      $region48: #{tpu_custom_call.1} parent=5 // pred_fallthru
        _
      %p707 = scmp.le.s32.totalorder 2, %s16
      // Predicated region
      $region53: #{tpu_custom_call.1} parent=5 // pred_check
        %p708 = pneg %p707
      $region54: #{tpu_custom_call.1} parent=5 // pred_check_branch
        %710 = sbr.rel (%p708) target = $region56
      $region55: #{tpu_custom_call.1} parent=5 // pred_region
        %s711 = ssub.s32 %s16, 2
        // Predicated region
        $region57: #{tpu_custom_call.1} parent=55 // pred_check
          %p712 = pneg %p213
        $region58: #{tpu_custom_call.1} parent=55 // pred_check_branch
          %714 = sbr.rel (%p712) target = $region60
        $region59: #{tpu_custom_call.1} parent=55 // pred_region
          %s715 = sand.u32 %s198, 1
          %s716 = scalar_lea.sflag [#allocation3], %s715
          %s717 = sand.u32 %s198, 1
          %s718 = smul.addr %s717, 8
          %s719 = scalar_lea.vmem [#allocation2], %s718
          %720 = dma.done %s716, 128
        $region60: #{tpu_custom_call.1} parent=55 // pred_fallthru
          _
      $region56: #{tpu_custom_call.1} parent=5 // pred_fallthru
        _
    $region6: #{tpu_custom_call.1} parent=1 // loop_footer
      %s20 = sadd.s32 1, %s16
    $region7: #{tpu_custom_call.1} parent=1 // loop_footer_branch
      %15 = sbr.rel target = $region3
    $region8: #{tpu_custom_call.1} parent=1 // loop_exit
      _
    %721 = vsyncpa [#allocation3], 1
    %s722 = scalar_lea.sflag [#allocation3], 1
    %723 = vsyncpa %s722, 1

</llo_original>
